<compile_context>
chip_gen: v7x
topology: tpu7x:2x2x1
jax: 0.10.0
libtpu: 0.0.40
codegen_flags: <defaults>
</compile_context>

<pallas_src>
import jax
import jax.numpy as jnp
from jax.experimental import pallas as pl
from jax.experimental.pallas import tpu as pltpu

NEGATIVE_SLOPE = 1.0 / 100.0
HIDDEN = (400, 300)


def _leaky_relu(x):
    return jnp.where(x > 0, x, NEGATIVE_SLOPE * x)


def _round_up(n, m):
    return (n + m - 1) // m * m


def _cdiv(a, b):
    return (a + b - 1) // b


def _is_v7x():
    try:
        return "v7" in jax.devices()[0].device_kind.lower()
    except Exception:
        return False


def _mlp_kernel(x_ref, w1_ref, b1_ref, w2_ref, b2_ref, w3_ref, b3_ref, o_ref):
    # Input cast happens in-kernel (x arrives row-padded f32, K = real D).
    x = x_ref[...].astype(jnp.bfloat16)
    # Layer 1: Linear (bf16 x bf16 -> f32 acc) + bias + LeakyReLU, recast bf16.
    h1 = jnp.dot(x, w1_ref[...], preferred_element_type=jnp.float32)
    h1 = _leaky_relu(h1 + b1_ref[...]).astype(jnp.bfloat16)
    # Layer 2.
    h2 = jnp.dot(h1, w2_ref[...], preferred_element_type=jnp.float32)
    h2 = _leaky_relu(h2 + b2_ref[...]).astype(jnp.bfloat16)
    # Layer 3: single output column -> VPU multiply + XLU reduce (no MXU pass,
    # no padded 128-lane matmul, no lane slice before the store).
    prod = h2.astype(jnp.float32) * w3_ref[...].astype(jnp.float32)  # (tb, H2p)
    o_ref[...] = jnp.sum(prod, axis=-1, keepdims=True) + b3_ref[...]


def prepare_params(params):
    """Pad hidden dims to 128-aligned shapes and cast weights to bf16 (ONCE).

    Zero padding is exact: padded hidden units get bias 0, leaky_relu(0)=0,
    and they feed zero weight rows / zero w3 entries of the next layer, so the
    real output column is unchanged. The input feature dim D is NOT padded.
    """
    (w1, b1), (w2, b2), (w3, b3) = params
    D = w1.shape[0]
    H1, H2 = w1.shape[1], w2.shape[1]
    H1p, H2p = _round_up(H1, 128), _round_up(H2, 128)

    bf = jnp.bfloat16
    w1p = jnp.zeros((D, H1p), bf).at[:, :H1].set(w1.astype(bf))
    b1p = jnp.zeros((1, H1p), jnp.float32).at[0, :H1].set(b1)
    w2p = jnp.zeros((H1p, H2p), bf).at[:H1, :H2].set(w2.astype(bf))
    b2p = jnp.zeros((1, H2p), jnp.float32).at[0, :H2].set(b2)
    # Layer-3 weight kept as a (1, H2p) row vector (consumed on VPU/XLU).
    w3p = jnp.zeros((1, H2p), bf).at[0, :H2].set(w3[:, 0].astype(bf))
    b3p = b3.reshape(1, 1).astype(jnp.float32)
    return D, (w1p, b1p, w2p, b2p, w3p, b3p)


def discriminator_forward(x, prepared, *, batch_tile=2048):
    """x: (B, state_dim + action_dim) float32. Returns (B, 1) float32."""
    D, (w1p, b1p, w2p, b2p, w3p, b3p) = prepared
    B = x.shape[0]
    assert x.shape[1] == D

    # 128-aligned batch tiling.
    Bp = _round_up(max(B, 8), 8)
    if Bp >= 128:
        Bp = _round_up(Bp, 128)
    n_tiles = _cdiv(Bp, batch_tile)
    # Only on v7x (2 TensorCores/chip) force >=2 grid steps so the "parallel"
    # batch axis can shard across cores; on 1-TC v5e/v6e it is pure overhead.
    if _is_v7x() and n_tiles == 1 and Bp >= 256:
        n_tiles = 2
    tb = Bp if n_tiles == 1 else _round_up(_cdiv(Bp, n_tiles), 128)
    Bp = n_tiles * tb

    # Only per-call plumbing: row-pad the f32 input (no lane pad, no cast;
    # the bf16 cast happens inside the kernel).
    xp = x if Bp == B else jnp.zeros((Bp, D), x.dtype).at[:B].set(x)

    out = pl.pallas_call(
        _mlp_kernel,
        out_shape=jax.ShapeDtypeStruct((Bp, 1), jnp.float32),
        grid_spec=pltpu.PrefetchScalarGridSpec(
            num_scalar_prefetch=0,
            grid=(n_tiles,),
            in_specs=[
                # x tile: last block dim == full array dim (D) -> legal.
                pl.BlockSpec((tb, D), lambda i: (i, 0)),
                pl.BlockSpec(w1p.shape, lambda i: (0, 0)),   # W1 (resident)
                pl.BlockSpec(b1p.shape, lambda i: (0, 0)),   # b1
                pl.BlockSpec(w2p.shape, lambda i: (0, 0)),   # W2
                pl.BlockSpec(b2p.shape, lambda i: (0, 0)),   # b2
                pl.BlockSpec(w3p.shape, lambda i: (0, 0)),   # w3 row (1, H2p)
                pl.BlockSpec(b3p.shape, lambda i: (0, 0)),   # b3 (1, 1)
            ],
            # 1-lane output block (last block dim == full array dim -> legal);
            # avoids writing 128x-padded rows back to HBM.
            out_specs=pl.BlockSpec((tb, 1), lambda i: (i, 0)),
        ),
        compiler_params=pltpu.CompilerParams(
            dimension_semantics=("parallel",),
            vmem_limit_bytes=48 * 1024 * 1024,
        ),
    )(xp, w1p, b1p, w2p, b2p, w3p, b3p)

    return out[:B, :]


def init_params(key, state_dim, action_dim):
    """Deterministic init mirroring PyTorch nn.Linear default (U[-1/sqrt(fan_in), +])."""
    in_dim = state_dim + action_dim
    dims = [in_dim, HIDDEN[0], HIDDEN[1], 1]
    params = []
    for i in range(3):
        fan_in, fan_out = dims[i], dims[i + 1]
        key, kw, kb = jax.random.split(key, 3)
        bound = 1.0 / jnp.sqrt(fan_in)
        w = jax.random.uniform(kw, (fan_in, fan_out), jnp.float32, -bound, bound)
        b = jax.random.uniform(kb, (fan_out,), jnp.float32, -bound, bound)
        params.append((w, b))
    return params


def reference_forward_bf16(x, params):
    """Same-precision reference: bf16 operands, f32 accumulation."""
    (w1, b1), (w2, b2), (w3, b3) = params
    bf = jnp.bfloat16
    h1 = _leaky_relu(
        jnp.dot(x.astype(bf), w1.astype(bf), preferred_element_type=jnp.float32) + b1
    )
    h2 = _leaky_relu(
        jnp.dot(h1.astype(bf), w2.astype(bf), preferred_element_type=jnp.float32) + b2
    )
    return jnp.dot(h2.astype(bf), w3.astype(bf), preferred_element_type=jnp.float32) + b3


def reference_forward_f32(x, params):
    (w1, b1), (w2, b2), (w3, b3) = params
    h1 = _leaky_relu(x @ w1 + b1)
    h2 = _leaky_relu(h1 @ w2 + b2)
    return h2 @ w3 + b3


if __name__ == "__main__":
    key = jax.random.PRNGKey(0)
    state_dim, action_dim = 12, 4

    kx, kp, kx2 = jax.random.split(key, 3)
    params = init_params(kp, state_dim, action_dim)
    prepared = prepare_params(params)

    # Small batch (exercises the tiny-tile path).
    batch = 2
    x = jax.random.normal(kx, (batch, state_dim + action_dim), jnp.float32)
    out = jax.block_until_ready(discriminator_forward(x, prepared))
    ref_bf16 = reference_forward_bf16(x, params)
    ref_f32 = reference_forward_f32(x, params)
    assert out.shape == (batch, 1), out.shape
    assert jnp.allclose(out, ref_bf16, atol=1e-3, rtol=1e-3), (out, ref_bf16)
    assert jnp.allclose(out, ref_f32, atol=5e-2, rtol=5e-2), (out, ref_f32)

    # Non-multiple batch (exercises row padding / 128-aligned tiling).
    batch2 = 200
    x2 = jax.random.normal(kx2, (batch2, state_dim + action_dim), jnp.float32)
    out2 = jax.block_until_ready(discriminator_forward(x2, prepared))
    ref2_bf16 = reference_forward_bf16(x2, params)
    ref2_f32 = reference_forward_f32(x2, params)
    assert out2.shape == (batch2, 1), out2.shape
    assert jnp.allclose(out2, ref2_bf16, atol=1e-3, rtol=1e-3)
    assert jnp.allclose(out2, ref2_f32, atol=5e-2, rtol=5e-2)

    print("KERNEL_OK")
</pallas_src>

<mosaic_0001>
module attributes {stable_mosaic.version = 11 : i64} {
  func.func @_mlp_kernel(%arg0: i32, %arg1: memref<8x16xf32, #tpu.memory_space<vmem>>, %arg2: memref<16x512xbf16, #tpu.memory_space<vmem>>, %arg3: memref<1x512xf32, #tpu.memory_space<vmem>>, %arg4: memref<512x384xbf16, #tpu.memory_space<vmem>>, %arg5: memref<1x384xf32, #tpu.memory_space<vmem>>, %arg6: memref<1x384xbf16, #tpu.memory_space<vmem>>, %arg7: memref<1x1xf32, #tpu.memory_space<vmem>>, %arg8: memref<8x1xf32, #tpu.memory_space<vmem>>) attributes {dimension_semantics = [#tpu.dimension_semantics<parallel>], iteration_bounds = array<i64: 1>, scalar_prefetch = 0 : i64, scratch_operands = 0 : i64, tpu.core_type = #tpu.core_type<tc>, window_params = [{transform_indices = @transform_0, window_bounds = array<i64: 8, 16>}, {pipeline_mode = #tpu.pipeline_mode<synchronous>, transform_indices = @transform_1, window_bounds = array<i64: 16, 512>}, {pipeline_mode = #tpu.pipeline_mode<synchronous>, transform_indices = @transform_2, window_bounds = array<i64: 1, 512>}, {pipeline_mode = #tpu.pipeline_mode<synchronous>, transform_indices = @transform_3, window_bounds = array<i64: 512, 384>}, {pipeline_mode = #tpu.pipeline_mode<synchronous>, transform_indices = @transform_4, window_bounds = array<i64: 1, 384>}, {pipeline_mode = #tpu.pipeline_mode<synchronous>, transform_indices = @transform_5, window_bounds = array<i64: 1, 384>}, {pipeline_mode = #tpu.pipeline_mode<synchronous>, transform_indices = @transform_6, window_bounds = array<i64: 1, 1>}, {transform_indices = @transform_7, window_bounds = array<i64: 8, 1>}]} {
    %c0 = arith.constant 0 : index
    %c0_0 = arith.constant 0 : index
    %0 = vector.load %arg1[%c0, %c0_0] : memref<8x16xf32, #tpu.memory_space<vmem>>, vector<8x16xf32>
    %1 = arith.truncf %0 : vector<8x16xf32> to vector<8x16xbf16>
    %c0_1 = arith.constant 0 : index
    %c0_2 = arith.constant 0 : index
    %2 = vector.load %arg2[%c0_1, %c0_2] : memref<16x512xbf16, #tpu.memory_space<vmem>>, vector<16x512xbf16>
    %cst = arith.constant dense<0.000000e+00> : vector<8x512xf32>
    %3 = tpu.matmul %1, %2, %cst {dimension_numbers = #tpu.dot_dimension_numbers<[1], [0], [0], [1], [0, 0, 1, 1], [], []>} : vector<8x16xbf16>, vector<16x512xbf16>, vector<8x512xf32> -> vector<8x512xf32>
    %c0_3 = arith.constant 0 : index
    %c0_4 = arith.constant 0 : index
    %4 = vector.load %arg3[%c0_3, %c0_4] : memref<1x512xf32, #tpu.memory_space<vmem>>, vector<1x512xf32>
    %5 = vector.broadcast %4 : vector<1x512xf32> to vector<8x512xf32>
    %6 = arith.addf %3, %5 : vector<8x512xf32>
    %cst_5 = arith.constant 0.000000e+00 : f32
    %7 = vector.broadcast %cst_5 : f32 to vector<8x512xf32>
    %8 = arith.cmpf ogt, %6, %7 : vector<8x512xf32>
    %cst_6 = arith.constant 0.00999999977 : f32
    %9 = vector.broadcast %cst_6 : f32 to vector<8x512xf32>
    %10 = arith.mulf %9, %6 : vector<8x512xf32>
    %11 = arith.select %8, %6, %10 : vector<8x512xi1>, vector<8x512xf32>
    %12 = arith.truncf %11 : vector<8x512xf32> to vector<8x512xbf16>
    %c0_7 = arith.constant 0 : index
    %c0_8 = arith.constant 0 : index
    %13 = vector.load %arg4[%c0_7, %c0_8] : memref<512x384xbf16, #tpu.memory_space<vmem>>, vector<512x384xbf16>
    %cst_9 = arith.constant dense<0.000000e+00> : vector<8x384xf32>
    %14 = tpu.matmul %12, %13, %cst_9 {dimension_numbers = #tpu.dot_dimension_numbers<[1], [0], [0], [1], [0, 0, 1, 1], [], []>} : vector<8x512xbf16>, vector<512x384xbf16>, vector<8x384xf32> -> vector<8x384xf32>
    %c0_10 = arith.constant 0 : index
    %c0_11 = arith.constant 0 : index
    %15 = vector.load %arg5[%c0_10, %c0_11] : memref<1x384xf32, #tpu.memory_space<vmem>>, vector<1x384xf32>
    %16 = vector.broadcast %15 : vector<1x384xf32> to vector<8x384xf32>
    %17 = arith.addf %14, %16 : vector<8x384xf32>
    %cst_12 = arith.constant 0.000000e+00 : f32
    %18 = vector.broadcast %cst_12 : f32 to vector<8x384xf32>
    %19 = arith.cmpf ogt, %17, %18 : vector<8x384xf32>
    %cst_13 = arith.constant 0.00999999977 : f32
    %20 = vector.broadcast %cst_13 : f32 to vector<8x384xf32>
    %21 = arith.mulf %20, %17 : vector<8x384xf32>
    %22 = arith.select %19, %17, %21 : vector<8x384xi1>, vector<8x384xf32>
    %23 = arith.truncf %22 : vector<8x384xf32> to vector<8x384xbf16>
    %24 = arith.extf %23 : vector<8x384xbf16> to vector<8x384xf32>
    %c0_14 = arith.constant 0 : index
    %c0_15 = arith.constant 0 : index
    %25 = vector.load %arg6[%c0_14, %c0_15] : memref<1x384xbf16, #tpu.memory_space<vmem>>, vector<1x384xbf16>
    %26 = arith.extf %25 : vector<1x384xbf16> to vector<1x384xf32>
    %27 = vector.broadcast %26 : vector<1x384xf32> to vector<8x384xf32>
    %28 = arith.mulf %24, %27 : vector<8x384xf32>
    %cst_16 = arith.constant dense<0.000000e+00> : vector<8xf32>
    %29 = vector.multi_reduction <add>, %28, %cst_16 [1] : vector<8x384xf32> to vector<8xf32>
    %30 = vector.shape_cast %29 : vector<8xf32> to vector<8x1xf32>
    %c0_17 = arith.constant 0 : index
    %c0_18 = arith.constant 0 : index
    %31 = vector.load %arg7[%c0_17, %c0_18] : memref<1x1xf32, #tpu.memory_space<vmem>>, vector<1x1xf32>
    %32 = vector.broadcast %31 : vector<1x1xf32> to vector<8x1xf32>
    %33 = arith.addf %30, %32 : vector<8x1xf32>
    %c0_19 = arith.constant 0 : index
    %c0_20 = arith.constant 0 : index
    %34 = vector.load %arg8[%c0_19, %c0_20] : memref<8x1xf32, #tpu.memory_space<vmem>>, vector<8x1xf32>
    tpu.vector_store %arg8[%c0_19, %c0_20], %33 {strides = array<i32>} : memref<8x1xf32, #tpu.memory_space<vmem>>, vector<8x1xf32>,
    return
  }
  func.func @transform_0(%arg0: i32) -> (i32, i32) {
    %c0_i32 = arith.constant 0 : i32
    %c0_i32_0 = arith.constant 0 : i32
    return %arg0, %c0_i32 : i32, i32
  }
  func.func @transform_1(%arg0: i32) -> (i32, i32) {
    %c0_i32 = arith.constant 0 : i32
    %c0_i32_0 = arith.constant 0 : i32
    %c0_i32_1 = arith.constant 0 : i32
    return %c0_i32, %c0_i32_0 : i32, i32
  }
  func.func @transform_2(%arg0: i32) -> (i32, i32) {
    %c0_i32 = arith.constant 0 : i32
    %c0_i32_0 = arith.constant 0 : i32
    %c0_i32_1 = arith.constant 0 : i32
    return %c0_i32, %c0_i32_0 : i32, i32
  }
  func.func @transform_3(%arg0: i32) -> (i32, i32) {
    %c0_i32 = arith.constant 0 : i32
    %c0_i32_0 = arith.constant 0 : i32
    %c0_i32_1 = arith.constant 0 : i32
    return %c0_i32, %c0_i32_0 : i32, i32
  }
  func.func @transform_4(%arg0: i32) -> (i32, i32) {
    %c0_i32 = arith.constant 0 : i32
    %c0_i32_0 = arith.constant 0 : i32
    %c0_i32_1 = arith.constant 0 : i32
    return %c0_i32, %c0_i32_0 : i32, i32
  }
  func.func @transform_5(%arg0: i32) -> (i32, i32) {
    %c0_i32 = arith.constant 0 : i32
    %c0_i32_0 = arith.constant 0 : i32
    %c0_i32_1 = arith.constant 0 : i32
    return %c0_i32, %c0_i32_0 : i32, i32
  }
  func.func @transform_6(%arg0: i32) -> (i32, i32) {
    %c0_i32 = arith.constant 0 : i32
    %c0_i32_0 = arith.constant 0 : i32
    %c0_i32_1 = arith.constant 0 : i32
    return %c0_i32, %c0_i32_0 : i32, i32
  }
  func.func @transform_7(%arg0: i32) -> (i32, i32) {
    %c0_i32 = arith.constant 0 : i32
    %c0_i32_0 = arith.constant 0 : i32
    return %arg0, %c0_i32 : i32, i32
  }
}

</mosaic_0001>

<llo_original>
// kernel: tpu_custom_call.1
$region0: #{tpu_custom_call.1}
  #allocation0 [shape = 'u32[]', space=smem, size = 0x4, offset = 0x4, fixed_abs, tag = 'smem constant byte address 0x4 - core index']
  #allocation1 [shape = 'u32[144,128]{1,0:T(1,128)}', space=vmem, size = 0x12000, scoped, tag = 'internal scratch']
  #allocation2 [shape = 'f32[1,1]{1,0:T(1,128)S(1)}', space=vmem, size = 0x200, scoped, tag = 'scoped memory for tpu_custom_call.1']
  %s0 = inlined_call_operand.hbm [shape: f32[8,16], index: 0, kind: input, shape index: {}]
  %s1 = inlined_call_operand.hbm [shape: bf16[16,512], index: 1, kind: input, shape index: {}]
  %s2 = inlined_call_operand.vmem [shape: f32[1,512], index: 2, kind: input, shape index: {}]
  %s3 = inlined_call_operand.hbm [shape: bf16[512,384], index: 3, kind: input, shape index: {}]
  %s4 = inlined_call_operand.vmem [shape: f32[1,384], index: 4, kind: input, shape index: {}]
  %s5 = inlined_call_operand.vmem [shape: bf16[1,384], index: 5, kind: input, shape index: {}]
  %s6 = inlined_call_operand.<no memory space> [shape: f32[1,1], index: 6, kind: input, shape index: {}]
  %s7 = inlined_call_operand.vmem [shape: f32[8,1], index: 7, kind: output, shape index: {}]
  %s8 = sld [smem:[#allocation0]]
  $region50: #{tpu_custom_call.1} parent=0
    _
  %s10 = ssub.s32 1, %s8
  %s11 = scalar_select 0, %s10, %s8
  %v12 = vstv %s6
  %13 = vst [vmem:[#allocation2] sm:$0x1] %v12
  $region1: #{tpu_custom_call.1} parent=0
    #allocation3 [shape = 'u8[4096]{0}', space=vmem, size = 0x1000, scoped, tag = 'input window, operand 0, single buffered']
    #allocation4 [shape = 's32[1]{0}', space=sflag, size = 0x4, scoped, tag = 'scoped memory for tpu_custom_call.1']
    #allocation5 [shape = 'u8[16384]{0}', space=vmem, size = 0x4000, scoped, tag = 'input window, operand 1, single buffered']
    #allocation6 [shape = 's32[1]{0}', space=sflag, size = 0x4, scoped, tag = 'scoped memory for tpu_custom_call.1']
    #allocation7 [shape = 'u8[393216]{0}', space=vmem, size = 0x60000, scoped, tag = 'input window, operand 3, single buffered']
    %14 = vsyncpa [#allocation4], 0
    %15 = vsyncpa [#allocation6], 0
    // Predicated region
    $region2: #{tpu_custom_call.1} parent=1 // pred_check
      _
    $region3: #{tpu_custom_call.1} parent=1 // pred_check_branch
      %17 = sbr.rel (0) target = $region5
    $region4: #{tpu_custom_call.1} parent=1 // pred_region
      %s19 = ssub.s32 128, 128
      %20 = vsyncadd [#allocation4], %s19
      %s22 = sshll.u32 [#allocation3], 4
      %s23 = int_to_ptr.vmem [resolvable:$true] %s22
      %25 = dma.hbm_to_vmem [thread:$0]  %s0, 128, %s23, [#allocation4]
    $region5: #{tpu_custom_call.1} parent=1 // pred_fallthru
      _
    // Predicated region
    $region6: #{tpu_custom_call.1} parent=1 // pred_check
      _
    $region7: #{tpu_custom_call.1} parent=1 // pred_check_branch
      %27 = sbr.rel (0) target = $region9
    $region8: #{tpu_custom_call.1} parent=1 // pred_region
      %s29 = ssub.s32 512, 512
      %30 = vsyncadd [#allocation6], %s29
      %s31 = sshll.u32 [#allocation5], 4
      %s32 = int_to_ptr.vmem [resolvable:$true] %s31
      %37 = dma.hbm_to_vmem [thread:$0]  %s1, 512, %s32, [#allocation6], 256, 256, 16
    $region9: #{tpu_custom_call.1} parent=1 // pred_fallthru
      _
    // Predicated region
    $region10: #{tpu_custom_call.1} parent=1 // pred_check
      _
    $region11: #{tpu_custom_call.1} parent=1 // pred_check_branch
      %39 = sbr.rel (0) target = $region13
    $region12: #{tpu_custom_call.1} parent=1 // pred_region
      _
    $region13: #{tpu_custom_call.1} parent=1 // pred_fallthru
      _
    // Predicated region
    $region14: #{tpu_custom_call.1} parent=1 // pred_check
      _
    $region15: #{tpu_custom_call.1} parent=1 // pred_check_branch
      %41 = sbr.rel (0) target = $region17
    $region16: #{tpu_custom_call.1} parent=1 // pred_region
      %s43 = ssub.s32 12288, 12288
      %44 = vsyncadd [#allocation6], %s43
      %s45 = sshll.u32 [#allocation7], 4
      %s46 = int_to_ptr.vmem [resolvable:$true] %s45
      %51 = dma.hbm_to_vmem [thread:$0]  %s3, 12288, %s46, [#allocation6], 192, 192, 12
    $region17: #{tpu_custom_call.1} parent=1 // pred_fallthru
      _
    // Predicated region
    $region18: #{tpu_custom_call.1} parent=1 // pred_check
      _
    $region19: #{tpu_custom_call.1} parent=1 // pred_check_branch
      %53 = sbr.rel (0) target = $region21
    $region20: #{tpu_custom_call.1} parent=1 // pred_region
      _
    $region21: #{tpu_custom_call.1} parent=1 // pred_fallthru
      _
    // Predicated region
    $region22: #{tpu_custom_call.1} parent=1 // pred_check
      _
    $region23: #{tpu_custom_call.1} parent=1 // pred_check_branch
      %55 = sbr.rel (0) target = $region25
    $region24: #{tpu_custom_call.1} parent=1 // pred_region
      _
    $region25: #{tpu_custom_call.1} parent=1 // pred_fallthru
      _
    // Predicated region
    $region26: #{tpu_custom_call.1} parent=1 // pred_check
      _
    $region27: #{tpu_custom_call.1} parent=1 // pred_check_branch
      %57 = sbr.rel (0) target = $region29
    $region28: #{tpu_custom_call.1} parent=1 // pred_region
      _
    $region29: #{tpu_custom_call.1} parent=1 // pred_fallthru
      _
    // Predicated region
    $region30: #{tpu_custom_call.1} parent=1 // pred_check
      _
    $region31: #{tpu_custom_call.1} parent=1 // pred_check_branch
      %59 = sbr.rel (0) target = $region33
    $region32: #{tpu_custom_call.1} parent=1 // pred_region
      %60 = dma.done [#allocation4], 128
    $region33: #{tpu_custom_call.1} parent=1 // pred_fallthru
      _
    // Predicated region
    $region34: #{tpu_custom_call.1} parent=1 // pred_check
      _
    $region35: #{tpu_custom_call.1} parent=1 // pred_check_branch
      %62 = sbr.rel (0) target = $region37
    $region36: #{tpu_custom_call.1} parent=1 // pred_region
      %63 = dma.done [#allocation6], 512
    $region37: #{tpu_custom_call.1} parent=1 // pred_fallthru
      _
    // Predicated region
    $region38: #{tpu_custom_call.1} parent=1 // pred_check
      _
    $region39: #{tpu_custom_call.1} parent=1 // pred_check_branch
      %65 = sbr.rel (0) target = $region41
    $region40: #{tpu_custom_call.1} parent=1 // pred_region
      %66 = dma.done [#allocation6], 12288
    $region41: #{tpu_custom_call.1} parent=1 // pred_fallthru
      _
    %v68 = vld [vmem:[#allocation3] sm:$0xff]
    %v69 = vpack.c.bf16 %v68, %v68
    %v70 = vld [vmem:[#allocation5] sm:$0xff]
    %v71 = vld [vmem:[#allocation5 + $0x8] sm:$0xff]
    %v72 = vld [vmem:[#allocation5 + $0x10] sm:$0xff]
    %v73 = vld [vmem:[#allocation5 + $0x18] sm:$0xff]
    %v74 = vld [vmem:[%s2] sm:$0xf]
    %v76 = vlaneseq
    %v77 = vshrl.u32 %v76, 7
    %v78 = vsub.s32 0, %v77
    %v79 = vrot.slane %v74, %v78
    %v80 = vlaneseq
    %v81 = vshrl.u32 %v80, 7
    %v82 = vsub.s32 1, %v81
    %v83 = vrot.slane %v74, %v82
    %v84 = vlaneseq
    %v85 = vshrl.u32 %v84, 7
    %v86 = vsub.s32 2, %v85
    %v87 = vrot.slane %v74, %v86
    %v88 = vlaneseq
    %v89 = vshrl.u32 %v88, 7
    %v90 = vsub.s32 3, %v89
    %v91 = vrot.slane %v74, %v90
    %v100 = vunpack.c.l.b16 %v70
    %v101 = vunpack.c.h.b16 %v70
    %v102 = vunpack.c.l.b16 %v71
    %v103 = vunpack.c.h.b16 %v71
    %v104 = vunpack.c.l.b16 %v72
    %v105 = vunpack.c.h.b16 %v72
    %v106 = vunpack.c.l.b16 %v73
    %v107 = vunpack.c.h.b16 %v73
    %v108 = vpack.c.b16 %v104, %v100
    %v109 = vpack.c.b16 %v105, %v101
    %v110 = vpack.c.b16 %v106, %v102
    %v111 = vpack.c.b16 %v107, %v103
    %vm116 = vcmask 130048
    %v118 = vsel %vm116, %v69, 0
    %120 = vmatprep.subr.bf16.mxu0 %v109
    %121 = vmatpush1.bf16.msra.mxu0 %v108
    %122 = vmatprep.subr.bf16.mxu0 0
    %123 = vmatpush1.bf16.msra.mxu0 0
    %124 = vmatprep.subr.bf16.mxu0 0
    %125 = vmatpush1.bf16.msra.mxu0 0
    %126 = vmatprep.subr.bf16.mxu0 0
    %127 = vmatpush1.bf16.msra.mxu0 0
    %128 = vmatprep.subr.bf16.mxu0 0
    %129 = vmatpush1.bf16.msra.mxu0 0
    %130 = vmatprep.subr.bf16.mxu0 0
    %131 = vmatpush1.bf16.msra.mxu0 0
    %132 = vmatprep.subr.bf16.mxu0 0
    %133 = vmatpush1.bf16.msra.mxu0 0
    %134 = vmatprep.subr.bf16.mxu0 0
    %135 = vmatpush1.bf16.msra.mxu0 0
    %136 = vmatprep.subr.bf16.mxu0 0
    %137 = vmatpush1.bf16.msra.mxu0 0
    %138 = vmatprep.subr.bf16.mxu0 0
    %139 = vmatpush1.bf16.msra.mxu0 0
    %140 = vmatprep.subr.bf16.mxu0 0
    %141 = vmatpush1.bf16.msra.mxu0 0
    %142 = vmatprep.subr.bf16.mxu0 0
    %143 = vmatpush1.bf16.msra.mxu0 0
    %144 = vmatprep.subr.bf16.mxu0 0
    %145 = vmatpush1.bf16.msra.mxu0 0
    %146 = vmatprep.subr.bf16.mxu0 0
    %147 = vmatpush1.bf16.msra.mxu0 0
    %148 = vmatprep.subr.bf16.mxu0 0
    %149 = vmatpush1.bf16.msra.mxu0 0
    %150 = vmatprep.subr.bf16.mxu0 0
    %151 = vmatpush1.bf16.msra.mxu0 0
    %152 = vmatprep.mubr.bf16.mxu0 0
    %153 = vmatmul.mubr.bf16.gmra.mrb[0].mxu0 %v118
    %v154 = vpop.f32.mrb[0].mxu0
    %v155 = vadd.f32 %v79, %v154
    %v156 = vpop.f32.mrb[0].mxu0
    %v157 = vadd.f32 %v83, %v156
    %v158 = vpop.f32.mrb[0].mxu0
    %v159 = vpop.f32.mrb[0].mxu0
    %160 = vdwg.mxu0
    %161 = vmatprep.subr.bf16.mxu0 %v111
    %162 = vmatpush1.bf16.msra.mxu0 %v110
    %163 = vmatprep.subr.bf16.mxu0 0
    %164 = vmatpush1.bf16.msra.mxu0 0
    %165 = vmatprep.subr.bf16.mxu0 0
    %166 = vmatpush1.bf16.msra.mxu0 0
    %167 = vmatprep.subr.bf16.mxu0 0
    %168 = vmatpush1.bf16.msra.mxu0 0
    %169 = vmatprep.subr.bf16.mxu0 0
    %170 = vmatpush1.bf16.msra.mxu0 0
    %171 = vmatprep.subr.bf16.mxu0 0
    %172 = vmatpush1.bf16.msra.mxu0 0
    %173 = vmatprep.subr.bf16.mxu0 0
    %174 = vmatpush1.bf16.msra.mxu0 0
    %175 = vmatprep.subr.bf16.mxu0 0
    %176 = vmatpush1.bf16.msra.mxu0 0
    %177 = vmatprep.subr.bf16.mxu0 0
    %178 = vmatpush1.bf16.msra.mxu0 0
    %179 = vmatprep.subr.bf16.mxu0 0
    %180 = vmatpush1.bf16.msra.mxu0 0
    %181 = vmatprep.subr.bf16.mxu0 0
    %182 = vmatpush1.bf16.msra.mxu0 0
    %183 = vmatprep.subr.bf16.mxu0 0
    %184 = vmatpush1.bf16.msra.mxu0 0
    %185 = vmatprep.subr.bf16.mxu0 0
    %186 = vmatpush1.bf16.msra.mxu0 0
    %187 = vmatprep.subr.bf16.mxu0 0
    %188 = vmatpush1.bf16.msra.mxu0 0
    %189 = vmatprep.subr.bf16.mxu0 0
    %190 = vmatpush1.bf16.msra.mxu0 0
    %191 = vmatprep.subr.bf16.mxu0 0
    %192 = vmatpush1.bf16.msra.mxu0 0
    %193 = vmatprep.mubr.bf16.mxu0 0
    %194 = vmatmul.mubr.bf16.gmra.mrb[0].mxu0 %v118
    %v195 = vpop.f32.mrb[0].mxu0
    %v196 = vadd.f32 %v87, %v195
    %v197 = vpop.f32.mrb[0].mxu0
    %v198 = vadd.f32 %v91, %v197
    %v199 = vpop.f32.mrb[0].mxu0
    %v200 = vpop.f32.mrb[0].mxu0
    %201 = vdwg.mxu0
    %vm202 = vcmp.gt.f32.partialorder %v155, 0.0
    %vm203 = vcmp.gt.f32.partialorder %v157, 0.0
    %vm204 = vcmp.gt.f32.partialorder %v196, 0.0
    %vm205 = vcmp.gt.f32.partialorder %v198, 0.0
    %v206 = vmul.f32 %v155, 0.01
    %v207 = vmul.f32 %v157, 0.01
    %v208 = vmul.f32 %v196, 0.01
    %v209 = vmul.f32 %v198, 0.01
    %v210 = vsel %vm202, %v155, %v206
    %v211 = vsel %vm203, %v157, %v207
    %v212 = vsel %vm204, %v196, %v208
    %v213 = vsel %vm205, %v198, %v209
    %v214 = vpack.c.bf16 %v210, %v210
    %v215 = vpack.c.bf16 %v211, %v211
    %v216 = vpack.c.bf16 %v212, %v212
    %v217 = vpack.c.bf16 %v213, %v213
    %v218 = vld [vmem:[#allocation7] sm:$0xff]
    %v219 = vld [vmem:[#allocation7 + $0x8] sm:$0xf]
    %v220 = vld [vmem:[#allocation7 + $0xc] sm:$0xff]
    %v221 = vld [vmem:[#allocation7 + $0x14] sm:$0xf]
    %v222 = vld [vmem:[#allocation7 + $0x18] sm:$0xff]
    %v223 = vld [vmem:[#allocation7 + $0x20] sm:$0xf]
    %v224 = vld [vmem:[#allocation7 + $0x24] sm:$0xff]
    %v225 = vld [vmem:[#allocation7 + $0x2c] sm:$0xf]
    %v226 = vld [vmem:[#allocation7 + $0x30] sm:$0xff]
    %v227 = vld [vmem:[#allocation7 + $0x38] sm:$0xf]
    %v228 = vld [vmem:[#allocation7 + $0x3c] sm:$0xff]
    %v229 = vld [vmem:[#allocation7 + $0x44] sm:$0xf]
    %v230 = vld [vmem:[#allocation7 + $0x48] sm:$0xff]
    %v231 = vld [vmem:[#allocation7 + $0x50] sm:$0xf]
    %v232 = vld [vmem:[#allocation7 + $0x54] sm:$0xff]
    %v233 = vld [vmem:[#allocation7 + $0x5c] sm:$0xf]
    %v234 = vld [vmem:[#allocation7 + $0x60] sm:$0xff]
    %v235 = vld [vmem:[#allocation7 + $0x68] sm:$0xf]
    %v236 = vld [vmem:[#allocation7 + $0x6c] sm:$0xff]
    %v237 = vld [vmem:[#allocation7 + $0x74] sm:$0xf]
    %v238 = vld [vmem:[#allocation7 + $0x78] sm:$0xff]
    %v239 = vld [vmem:[#allocation7 + $0x80] sm:$0xf]
    %v240 = vld [vmem:[#allocation7 + $0x84] sm:$0xff]
    %v241 = vld [vmem:[#allocation7 + $0x8c] sm:$0xf]
    %v242 = vld [vmem:[#allocation7 + $0x90] sm:$0xff]
    %v243 = vld [vmem:[#allocation7 + $0x98] sm:$0xf]
    %v244 = vld [vmem:[#allocation7 + $0x9c] sm:$0xff]
    %v245 = vld [vmem:[#allocation7 + $0xa4] sm:$0xf]
    %v246 = vld [vmem:[#allocation7 + $0xa8] sm:$0xff]
    %v247 = vld [vmem:[#allocation7 + $0xb0] sm:$0xf]
    %v248 = vld [vmem:[#allocation7 + $0xb4] sm:$0xff]
    %v249 = vld [vmem:[#allocation7 + $0xbc] sm:$0xf]
    %v250 = vld [vmem:[#allocation7 + $0xc0] sm:$0xff]
    %v251 = vld [vmem:[#allocation7 + $0xc8] sm:$0xf]
    %v252 = vld [vmem:[#allocation7 + $0xcc] sm:$0xff]
    %v253 = vld [vmem:[#allocation7 + $0xd4] sm:$0xf]
    %v254 = vld [vmem:[#allocation7 + $0xd8] sm:$0xff]
    %v255 = vld [vmem:[#allocation7 + $0xe0] sm:$0xf]
    %v256 = vld [vmem:[#allocation7 + $0xe4] sm:$0xff]
    %v257 = vld [vmem:[#allocation7 + $0xec] sm:$0xf]
    %v258 = vld [vmem:[#allocation7 + $0xf0] sm:$0xff]
    %v259 = vld [vmem:[#allocation7 + $0xf8] sm:$0xf]
    %v260 = vld [vmem:[#allocation7 + $0xfc] sm:$0xff]
    %v261 = vld [vmem:[#allocation7 + $0x104] sm:$0xf]
    %v262 = vld [vmem:[#allocation7 + $0x108] sm:$0xff]
    %v263 = vld [vmem:[#allocation7 + $0x110] sm:$0xf]
    %v264 = vld [vmem:[#allocation7 + $0x114] sm:$0xff]
    %v265 = vld [vmem:[#allocation7 + $0x11c] sm:$0xf]
    %v266 = vld [vmem:[#allocation7 + $0x120] sm:$0xff]
    %v267 = vld [vmem:[#allocation7 + $0x128] sm:$0xf]
    %v268 = vld [vmem:[#allocation7 + $0x12c] sm:$0xff]
    %v269 = vld [vmem:[#allocation7 + $0x134] sm:$0xf]
    %v270 = vld [vmem:[#allocation7 + $0x138] sm:$0xff]
    %v271 = vld [vmem:[#allocation7 + $0x140] sm:$0xf]
    %v272 = vld [vmem:[#allocation7 + $0x144] sm:$0xff]
    %v273 = vld [vmem:[#allocation7 + $0x14c] sm:$0xf]
    %v274 = vld [vmem:[#allocation7 + $0x150] sm:$0xff]
    %v275 = vld [vmem:[#allocation7 + $0x158] sm:$0xf]
    %v276 = vld [vmem:[#allocation7 + $0x15c] sm:$0xff]
    %v277 = vld [vmem:[#allocation7 + $0x164] sm:$0xf]
    %v278 = vld [vmem:[#allocation7 + $0x168] sm:$0xff]
    %v279 = vld [vmem:[#allocation7 + $0x170] sm:$0xf]
    %v280 = vld [vmem:[#allocation7 + $0x174] sm:$0xff]
    %v281 = vld [vmem:[#allocation7 + $0x17c] sm:$0xf]
    %v282 = vld [vmem:[#allocation7 + $0x180] sm:$0xff]
    %v283 = vld [vmem:[#allocation7 + $0x188] sm:$0xf]
    %v284 = vld [vmem:[#allocation7 + $0x18c] sm:$0xff]
    %v285 = vld [vmem:[#allocation7 + $0x194] sm:$0xf]
    %v286 = vld [vmem:[#allocation7 + $0x198] sm:$0xff]
    %v287 = vld [vmem:[#allocation7 + $0x1a0] sm:$0xf]
    %v288 = vld [vmem:[#allocation7 + $0x1a4] sm:$0xff]
    %v289 = vld [vmem:[#allocation7 + $0x1ac] sm:$0xf]
    %v290 = vld [vmem:[#allocation7 + $0x1b0] sm:$0xff]
    %v291 = vld [vmem:[#allocation7 + $0x1b8] sm:$0xf]
    %v292 = vld [vmem:[#allocation7 + $0x1bc] sm:$0xff]
    %v293 = vld [vmem:[#allocation7 + $0x1c4] sm:$0xf]
    %v294 = vld [vmem:[#allocation7 + $0x1c8] sm:$0xff]
    %v295 = vld [vmem:[#allocation7 + $0x1d0] sm:$0xf]
    %v296 = vld [vmem:[#allocation7 + $0x1d4] sm:$0xff]
    %v297 = vld [vmem:[#allocation7 + $0x1dc] sm:$0xf]
    %v298 = vld [vmem:[#allocation7 + $0x1e0] sm:$0xff]
    %v299 = vld [vmem:[#allocation7 + $0x1e8] sm:$0xf]
    %v300 = vld [vmem:[#allocation7 + $0x1ec] sm:$0xff]
    %v301 = vld [vmem:[#allocation7 + $0x1f4] sm:$0xf]
    %v302 = vld [vmem:[#allocation7 + $0x1f8] sm:$0xff]
    %v303 = vld [vmem:[#allocation7 + $0x200] sm:$0xf]
    %v304 = vld [vmem:[#allocation7 + $0x204] sm:$0xff]
    %v305 = vld [vmem:[#allocation7 + $0x20c] sm:$0xf]
    %v306 = vld [vmem:[#allocation7 + $0x210] sm:$0xff]
    %v307 = vld [vmem:[#allocation7 + $0x218] sm:$0xf]
    %v308 = vld [vmem:[#allocation7 + $0x21c] sm:$0xff]
    %v309 = vld [vmem:[#allocation7 + $0x224] sm:$0xf]
    %v310 = vld [vmem:[#allocation7 + $0x228] sm:$0xff]
    %v311 = vld [vmem:[#allocation7 + $0x230] sm:$0xf]
    %v312 = vld [vmem:[#allocation7 + $0x234] sm:$0xff]
    %v313 = vld [vmem:[#allocation7 + $0x23c] sm:$0xf]
    %v314 = vld [vmem:[#allocation7 + $0x240] sm:$0xff]
    %v315 = vld [vmem:[#allocation7 + $0x248] sm:$0xf]
    %v316 = vld [vmem:[#allocation7 + $0x24c] sm:$0xff]
    %v317 = vld [vmem:[#allocation7 + $0x254] sm:$0xf]
    %v318 = vld [vmem:[#allocation7 + $0x258] sm:$0xff]
    %v319 = vld [vmem:[#allocation7 + $0x260] sm:$0xf]
    %v320 = vld [vmem:[#allocation7 + $0x264] sm:$0xff]
    %v321 = vld [vmem:[#allocation7 + $0x26c] sm:$0xf]
    %v322 = vld [vmem:[#allocation7 + $0x270] sm:$0xff]
    %v323 = vld [vmem:[#allocation7 + $0x278] sm:$0xf]
    %v324 = vld [vmem:[#allocation7 + $0x27c] sm:$0xff]
    %v325 = vld [vmem:[#allocation7 + $0x284] sm:$0xf]
    %v326 = vld [vmem:[#allocation7 + $0x288] sm:$0xff]
    %v327 = vld [vmem:[#allocation7 + $0x290] sm:$0xf]
    %v328 = vld [vmem:[#allocation7 + $0x294] sm:$0xff]
    %v329 = vld [vmem:[#allocation7 + $0x29c] sm:$0xf]
    %v330 = vld [vmem:[#allocation7 + $0x2a0] sm:$0xff]
    %v331 = vld [vmem:[#allocation7 + $0x2a8] sm:$0xf]
    %v332 = vld [vmem:[#allocation7 + $0x2ac] sm:$0xff]
    %v333 = vld [vmem:[#allocation7 + $0x2b4] sm:$0xf]
    %v334 = vld [vmem:[#allocation7 + $0x2b8] sm:$0xff]
    %v335 = vld [vmem:[#allocation7 + $0x2c0] sm:$0xf]
    %v336 = vld [vmem:[#allocation7 + $0x2c4] sm:$0xff]
    %v337 = vld [vmem:[#allocation7 + $0x2cc] sm:$0xf]
    %v338 = vld [vmem:[#allocation7 + $0x2d0] sm:$0xff]
    %v339 = vld [vmem:[#allocation7 + $0x2d8] sm:$0xf]
    %v340 = vld [vmem:[#allocation7 + $0x2dc] sm:$0xff]
    %v341 = vld [vmem:[#allocation7 + $0x2e4] sm:$0xf]
    %v342 = vld [vmem:[#allocation7 + $0x2e8] sm:$0xff]
    %v343 = vld [vmem:[#allocation7 + $0x2f0] sm:$0xf]
    %v344 = vld [vmem:[#allocation7 + $0x2f4] sm:$0xff]
    %v345 = vld [vmem:[#allocation7 + $0x2fc] sm:$0xf]
    %v346 = vld [vmem:[%s4] sm:$0x7]
    %v348 = vlaneseq
    %v349 = vshrl.u32 %v348, 7
    %v350 = vsub.s32 0, %v349
    %v351 = vrot.slane %v346, %v350
    %v352 = vlaneseq
    %v353 = vshrl.u32 %v352, 7
    %v354 = vsub.s32 1, %v353
    %v355 = vrot.slane %v346, %v354
    %v356 = vlaneseq
    %v357 = vshrl.u32 %v356, 7
    %v358 = vsub.s32 2, %v357
    %v359 = vrot.slane %v346, %v358
    %v491 = vunpack.c.l.b16 %v218
    %v492 = vunpack.c.h.b16 %v218
    %v493 = vunpack.c.l.b16 %v219
    %v494 = vunpack.c.l.b16 %v220
    %v495 = vunpack.c.h.b16 %v220
    %v496 = vunpack.c.l.b16 %v221
    %v497 = vunpack.c.l.b16 %v222
    %v498 = vunpack.c.h.b16 %v222
    %v499 = vunpack.c.l.b16 %v223
    %v500 = vunpack.c.l.b16 %v224
    %v501 = vunpack.c.h.b16 %v224
    %v502 = vunpack.c.l.b16 %v225
    %v503 = vunpack.c.l.b16 %v226
    %v504 = vunpack.c.h.b16 %v226
    %v505 = vunpack.c.l.b16 %v227
    %v506 = vunpack.c.l.b16 %v228
    %v507 = vunpack.c.h.b16 %v228
    %v508 = vunpack.c.l.b16 %v229
    %v509 = vunpack.c.l.b16 %v230
    %v510 = vunpack.c.h.b16 %v230
    %v511 = vunpack.c.l.b16 %v231
    %v512 = vunpack.c.l.b16 %v232
    %v513 = vunpack.c.h.b16 %v232
    %v514 = vunpack.c.l.b16 %v233
    %v515 = vunpack.c.l.b16 %v234
    %v516 = vunpack.c.h.b16 %v234
    %v517 = vunpack.c.l.b16 %v235
    %v518 = vunpack.c.l.b16 %v236
    %v519 = vunpack.c.h.b16 %v236
    %v520 = vunpack.c.l.b16 %v237
    %v521 = vunpack.c.l.b16 %v238
    %v522 = vunpack.c.h.b16 %v238
    %v523 = vunpack.c.l.b16 %v239
    %v524 = vunpack.c.l.b16 %v240
    %v525 = vunpack.c.h.b16 %v240
    %v526 = vunpack.c.l.b16 %v241
    %v527 = vunpack.c.l.b16 %v242
    %v528 = vunpack.c.h.b16 %v242
    %v529 = vunpack.c.l.b16 %v243
    %v530 = vunpack.c.l.b16 %v244
    %v531 = vunpack.c.h.b16 %v244
    %v532 = vunpack.c.l.b16 %v245
    %v533 = vunpack.c.l.b16 %v246
    %v534 = vunpack.c.h.b16 %v246
    %v535 = vunpack.c.l.b16 %v247
    %v536 = vunpack.c.l.b16 %v248
    %v537 = vunpack.c.h.b16 %v248
    %v538 = vunpack.c.l.b16 %v249
    %v539 = vunpack.c.l.b16 %v250
    %v540 = vunpack.c.h.b16 %v250
    %v541 = vunpack.c.l.b16 %v251
    %v542 = vunpack.c.l.b16 %v252
    %v543 = vunpack.c.h.b16 %v252
    %v544 = vunpack.c.l.b16 %v253
    %v545 = vunpack.c.l.b16 %v254
    %v546 = vunpack.c.h.b16 %v254
    %v547 = vunpack.c.l.b16 %v255
    %v548 = vunpack.c.l.b16 %v256
    %v549 = vunpack.c.h.b16 %v256
    %v550 = vunpack.c.l.b16 %v257
    %v551 = vunpack.c.l.b16 %v258
    %v552 = vunpack.c.h.b16 %v258
    %v553 = vunpack.c.l.b16 %v259
    %v554 = vunpack.c.l.b16 %v260
    %v555 = vunpack.c.h.b16 %v260
    %v556 = vunpack.c.l.b16 %v261
    %v557 = vunpack.c.l.b16 %v262
    %v558 = vunpack.c.h.b16 %v262
    %v559 = vunpack.c.l.b16 %v263
    %v560 = vunpack.c.l.b16 %v264
    %v561 = vunpack.c.h.b16 %v264
    %v562 = vunpack.c.l.b16 %v265
    %v563 = vunpack.c.l.b16 %v266
    %v564 = vunpack.c.h.b16 %v266
    %v565 = vunpack.c.l.b16 %v267
    %v566 = vunpack.c.l.b16 %v268
    %v567 = vunpack.c.h.b16 %v268
    %v568 = vunpack.c.l.b16 %v269
    %v569 = vunpack.c.l.b16 %v270
    %v570 = vunpack.c.h.b16 %v270
    %v571 = vunpack.c.l.b16 %v271
    %v572 = vunpack.c.l.b16 %v272
    %v573 = vunpack.c.h.b16 %v272
    %v574 = vunpack.c.l.b16 %v273
    %v575 = vunpack.c.l.b16 %v274
    %v576 = vunpack.c.h.b16 %v274
    %v577 = vunpack.c.l.b16 %v275
    %v578 = vunpack.c.l.b16 %v276
    %v579 = vunpack.c.h.b16 %v276
    %v580 = vunpack.c.l.b16 %v277
    %v581 = vunpack.c.l.b16 %v278
    %v582 = vunpack.c.h.b16 %v278
    %v583 = vunpack.c.l.b16 %v279
    %v584 = vunpack.c.l.b16 %v280
    %v585 = vunpack.c.h.b16 %v280
    %v586 = vunpack.c.l.b16 %v281
    %v587 = vunpack.c.l.b16 %v282
    %v588 = vunpack.c.h.b16 %v282
    %v589 = vunpack.c.l.b16 %v283
    %v590 = vunpack.c.l.b16 %v284
    %v591 = vunpack.c.h.b16 %v284
    %v592 = vunpack.c.l.b16 %v285
    %v593 = vunpack.c.l.b16 %v286
    %v594 = vunpack.c.h.b16 %v286
    %v595 = vunpack.c.l.b16 %v287
    %v596 = vunpack.c.l.b16 %v288
    %v597 = vunpack.c.h.b16 %v288
    %v598 = vunpack.c.l.b16 %v289
    %v599 = vunpack.c.l.b16 %v290
    %v600 = vunpack.c.h.b16 %v290
    %v601 = vunpack.c.l.b16 %v291
    %v602 = vunpack.c.l.b16 %v292
    %v603 = vunpack.c.h.b16 %v292
    %v604 = vunpack.c.l.b16 %v293
    %v605 = vunpack.c.l.b16 %v294
    %v606 = vunpack.c.h.b16 %v294
    %v607 = vunpack.c.l.b16 %v295
    %v608 = vunpack.c.l.b16 %v296
    %v609 = vunpack.c.h.b16 %v296
    %v610 = vunpack.c.l.b16 %v297
    %v611 = vunpack.c.l.b16 %v298
    %v612 = vunpack.c.h.b16 %v298
    %v613 = vunpack.c.l.b16 %v299
    %v614 = vunpack.c.l.b16 %v300
    %v615 = vunpack.c.h.b16 %v300
    %v616 = vunpack.c.l.b16 %v301
    %v617 = vunpack.c.l.b16 %v302
    %v618 = vunpack.c.h.b16 %v302
    %v619 = vunpack.c.l.b16 %v303
    %v620 = vunpack.c.l.b16 %v304
    %v621 = vunpack.c.h.b16 %v304
    %v622 = vunpack.c.l.b16 %v305
    %v623 = vunpack.c.l.b16 %v306
    %v624 = vunpack.c.h.b16 %v306
    %v625 = vunpack.c.l.b16 %v307
    %v626 = vunpack.c.l.b16 %v308
    %v627 = vunpack.c.h.b16 %v308
    %v628 = vunpack.c.l.b16 %v309
    %v629 = vunpack.c.l.b16 %v310
    %v630 = vunpack.c.h.b16 %v310
    %v631 = vunpack.c.l.b16 %v311
    %v632 = vunpack.c.l.b16 %v312
    %v633 = vunpack.c.h.b16 %v312
    %v634 = vunpack.c.l.b16 %v313
    %v635 = vunpack.c.l.b16 %v314
    %v636 = vunpack.c.h.b16 %v314
    %v637 = vunpack.c.l.b16 %v315
    %v638 = vunpack.c.l.b16 %v316
    %v639 = vunpack.c.h.b16 %v316
    %v640 = vunpack.c.l.b16 %v317
    %v641 = vunpack.c.l.b16 %v318
    %v642 = vunpack.c.h.b16 %v318
    %v643 = vunpack.c.l.b16 %v319
    %v644 = vunpack.c.l.b16 %v320
    %v645 = vunpack.c.h.b16 %v320
    %v646 = vunpack.c.l.b16 %v321
    %v647 = vunpack.c.l.b16 %v322
    %v648 = vunpack.c.h.b16 %v322
    %v649 = vunpack.c.l.b16 %v323
    %v650 = vunpack.c.l.b16 %v324
    %v651 = vunpack.c.h.b16 %v324
    %v652 = vunpack.c.l.b16 %v325
    %v653 = vunpack.c.l.b16 %v326
    %v654 = vunpack.c.h.b16 %v326
    %v655 = vunpack.c.l.b16 %v327
    %v656 = vunpack.c.l.b16 %v328
    %v657 = vunpack.c.h.b16 %v328
    %v658 = vunpack.c.l.b16 %v329
    %v659 = vunpack.c.l.b16 %v330
    %v660 = vunpack.c.h.b16 %v330
    %v661 = vunpack.c.l.b16 %v331
    %v662 = vunpack.c.l.b16 %v332
    %v663 = vunpack.c.h.b16 %v332
    %v664 = vunpack.c.l.b16 %v333
    %v665 = vunpack.c.l.b16 %v334
    %v666 = vunpack.c.h.b16 %v334
    %v667 = vunpack.c.l.b16 %v335
    %v668 = vunpack.c.l.b16 %v336
    %v669 = vunpack.c.h.b16 %v336
    %v670 = vunpack.c.l.b16 %v337
    %v671 = vunpack.c.l.b16 %v338
    %v672 = vunpack.c.h.b16 %v338
    %v673 = vunpack.c.l.b16 %v339
    %v674 = vunpack.c.l.b16 %v340
    %v675 = vunpack.c.h.b16 %v340
    %v676 = vunpack.c.l.b16 %v341
    %v677 = vunpack.c.l.b16 %v342
    %v678 = vunpack.c.h.b16 %v342
    %v679 = vunpack.c.l.b16 %v343
    %v680 = vunpack.c.l.b16 %v344
    %v681 = vunpack.c.h.b16 %v344
    %v682 = vunpack.c.l.b16 %v345
    %v683 = vpack.c.b16 %v494, %v491
    %v684 = vpack.c.b16 %v495, %v492
    %v685 = vpack.c.b16 %v496, %v493
    %v686 = vpack.c.b16 %v500, %v497
    %v687 = vpack.c.b16 %v501, %v498
    %v688 = vpack.c.b16 %v502, %v499
    %v689 = vpack.c.b16 %v506, %v503
    %v690 = vpack.c.b16 %v507, %v504
    %v691 = vpack.c.b16 %v508, %v505
    %v692 = vpack.c.b16 %v512, %v509
    %v693 = vpack.c.b16 %v513, %v510
    %v694 = vpack.c.b16 %v514, %v511
    %v695 = vpack.c.b16 %v518, %v515
    %v696 = vpack.c.b16 %v519, %v516
    %v697 = vpack.c.b16 %v520, %v517
    %v698 = vpack.c.b16 %v524, %v521
    %v699 = vpack.c.b16 %v525, %v522
    %v700 = vpack.c.b16 %v526, %v523
    %v701 = vpack.c.b16 %v530, %v527
    %v702 = vpack.c.b16 %v531, %v528
    %v703 = vpack.c.b16 %v532, %v529
    %v704 = vpack.c.b16 %v536, %v533
    %v705 = vpack.c.b16 %v537, %v534
    %v706 = vpack.c.b16 %v538, %v535
    %v707 = vpack.c.b16 %v542, %v539
    %v708 = vpack.c.b16 %v543, %v540
    %v709 = vpack.c.b16 %v544, %v541
    %v710 = vpack.c.b16 %v548, %v545
    %v711 = vpack.c.b16 %v549, %v546
    %v712 = vpack.c.b16 %v550, %v547
    %v713 = vpack.c.b16 %v554, %v551
    %v714 = vpack.c.b16 %v555, %v552
    %v715 = vpack.c.b16 %v556, %v553
    %v716 = vpack.c.b16 %v560, %v557
    %v717 = vpack.c.b16 %v561, %v558
    %v718 = vpack.c.b16 %v562, %v559
    %v719 = vpack.c.b16 %v566, %v563
    %v720 = vpack.c.b16 %v567, %v564
    %v721 = vpack.c.b16 %v568, %v565
    %v722 = vpack.c.b16 %v572, %v569
    %v723 = vpack.c.b16 %v573, %v570
    %v724 = vpack.c.b16 %v574, %v571
    %v725 = vpack.c.b16 %v578, %v575
    %v726 = vpack.c.b16 %v579, %v576
    %v727 = vpack.c.b16 %v580, %v577
    %v728 = vpack.c.b16 %v584, %v581
    %v729 = vpack.c.b16 %v585, %v582
    %v730 = vpack.c.b16 %v586, %v583
    %v731 = vpack.c.b16 %v590, %v587
    %v732 = vpack.c.b16 %v591, %v588
    %v733 = vpack.c.b16 %v592, %v589
    %v734 = vpack.c.b16 %v596, %v593
    %v735 = vpack.c.b16 %v597, %v594
    %v736 = vpack.c.b16 %v598, %v595
    %v737 = vpack.c.b16 %v602, %v599
    %v738 = vpack.c.b16 %v603, %v600
    %v739 = vpack.c.b16 %v604, %v601
    %v740 = vpack.c.b16 %v608, %v605
    %v741 = vpack.c.b16 %v609, %v606
    %v742 = vpack.c.b16 %v610, %v607
    %v743 = vpack.c.b16 %v614, %v611
    %v744 = vpack.c.b16 %v615, %v612
    %v745 = vpack.c.b16 %v616, %v613
    %v746 = vpack.c.b16 %v620, %v617
    %v747 = vpack.c.b16 %v621, %v618
    %v748 = vpack.c.b16 %v622, %v619
    %v749 = vpack.c.b16 %v626, %v623
    %v750 = vpack.c.b16 %v627, %v624
    %v751 = vpack.c.b16 %v628, %v625
    %v752 = vpack.c.b16 %v632, %v629
    %v753 = vpack.c.b16 %v633, %v630
    %v754 = vpack.c.b16 %v634, %v631
    %v755 = vpack.c.b16 %v638, %v635
    %v756 = vpack.c.b16 %v639, %v636
    %v757 = vpack.c.b16 %v640, %v637
    %v758 = vpack.c.b16 %v644, %v641
    %v759 = vpack.c.b16 %v645, %v642
    %v760 = vpack.c.b16 %v646, %v643
    %v761 = vpack.c.b16 %v650, %v647
    %v762 = vpack.c.b16 %v651, %v648
    %v763 = vpack.c.b16 %v652, %v649
    %v764 = vpack.c.b16 %v656, %v653
    %v765 = vpack.c.b16 %v657, %v654
    %v766 = vpack.c.b16 %v658, %v655
    %v767 = vpack.c.b16 %v662, %v659
    %v768 = vpack.c.b16 %v663, %v660
    %v769 = vpack.c.b16 %v664, %v661
    %v770 = vpack.c.b16 %v668, %v665
    %v771 = vpack.c.b16 %v669, %v666
    %v772 = vpack.c.b16 %v670, %v667
    %v773 = vpack.c.b16 %v674, %v671
    %v774 = vpack.c.b16 %v675, %v672
    %v775 = vpack.c.b16 %v676, %v673
    %v776 = vpack.c.b16 %v680, %v677
    %v777 = vpack.c.b16 %v681, %v678
    %v778 = vpack.c.b16 %v682, %v679
    %875 = vmatprep.subr.bf16.mxu0 %v684
    %876 = vmatpush1.bf16.msra.mxu0 %v683
    %877 = vmatprep.subr.bf16.mxu0 %v687
    %878 = vmatpush1.bf16.msra.mxu0 %v686
    %879 = vmatprep.subr.bf16.mxu0 %v690
    %880 = vmatpush1.bf16.msra.mxu0 %v689
    %881 = vmatprep.subr.bf16.mxu0 %v693
    %882 = vmatpush1.bf16.msra.mxu0 %v692
    %883 = vmatprep.subr.bf16.mxu0 %v696
    %884 = vmatpush1.bf16.msra.mxu0 %v695
    %885 = vmatprep.subr.bf16.mxu0 %v699
    %886 = vmatpush1.bf16.msra.mxu0 %v698
    %887 = vmatprep.subr.bf16.mxu0 %v702
    %888 = vmatpush1.bf16.msra.mxu0 %v701
    %889 = vmatprep.subr.bf16.mxu0 %v705
    %890 = vmatpush1.bf16.msra.mxu0 %v704
    %891 = vmatprep.subr.bf16.mxu0 %v708
    %892 = vmatpush1.bf16.msra.mxu0 %v707
    %893 = vmatprep.subr.bf16.mxu0 %v711
    %894 = vmatpush1.bf16.msra.mxu0 %v710
    %895 = vmatprep.subr.bf16.mxu0 %v714
    %896 = vmatpush1.bf16.msra.mxu0 %v713
    %897 = vmatprep.subr.bf16.mxu0 %v717
    %898 = vmatpush1.bf16.msra.mxu0 %v716
    %899 = vmatprep.subr.bf16.mxu0 %v720
    %900 = vmatpush1.bf16.msra.mxu0 %v719
    %901 = vmatprep.subr.bf16.mxu0 %v723
    %902 = vmatpush1.bf16.msra.mxu0 %v722
    %903 = vmatprep.subr.bf16.mxu0 %v726
    %904 = vmatpush1.bf16.msra.mxu0 %v725
    %905 = vmatprep.subr.bf16.mxu0 %v729
    %906 = vmatpush1.bf16.msra.mxu0 %v728
    %907 = vmatprep.mubr.bf16.mxu0 %v215
    %908 = vmatmul.mubr.bf16.gmra.mrb[0].mxu0 %v214
    %v909 = vpop.f32.mrb[0].mxu0
    %v910 = vadd.f32 %v351, %v909
    %v911 = vpop.f32.mrb[0].mxu0
    %v912 = vadd.f32 %v355, %v911
    %v913 = vpop.f32.mrb[0].mxu0
    %v914 = vpop.f32.mrb[0].mxu0
    %915 = vdwg.mxu0
    %916 = vmatprep.subr.bf16.mxu0 %v732
    %917 = vmatpush1.bf16.msra.mxu0 %v731
    %918 = vmatprep.subr.bf16.mxu0 %v735
    %919 = vmatpush1.bf16.msra.mxu0 %v734
    %920 = vmatprep.subr.bf16.mxu0 %v738
    %921 = vmatpush1.bf16.msra.mxu0 %v737
    %922 = vmatprep.subr.bf16.mxu0 %v741
    %923 = vmatpush1.bf16.msra.mxu0 %v740
    %924 = vmatprep.subr.bf16.mxu0 %v744
    %925 = vmatpush1.bf16.msra.mxu0 %v743
    %926 = vmatprep.subr.bf16.mxu0 %v747
    %927 = vmatpush1.bf16.msra.mxu0 %v746
    %928 = vmatprep.subr.bf16.mxu0 %v750
    %929 = vmatpush1.bf16.msra.mxu0 %v749
    %930 = vmatprep.subr.bf16.mxu0 %v753
    %931 = vmatpush1.bf16.msra.mxu0 %v752
    %932 = vmatprep.subr.bf16.mxu0 %v756
    %933 = vmatpush1.bf16.msra.mxu0 %v755
    %934 = vmatprep.subr.bf16.mxu0 %v759
    %935 = vmatpush1.bf16.msra.mxu0 %v758
    %936 = vmatprep.subr.bf16.mxu0 %v762
    %937 = vmatpush1.bf16.msra.mxu0 %v761
    %938 = vmatprep.subr.bf16.mxu0 %v765
    %939 = vmatpush1.bf16.msra.mxu0 %v764
    %940 = vmatprep.subr.bf16.mxu0 %v768
    %941 = vmatpush1.bf16.msra.mxu0 %v767
    %942 = vmatprep.subr.bf16.mxu0 %v771
    %943 = vmatpush1.bf16.msra.mxu0 %v770
    %944 = vmatprep.subr.bf16.mxu0 %v774
    %945 = vmatpush1.bf16.msra.mxu0 %v773
    %946 = vmatprep.subr.bf16.mxu0 %v777
    %947 = vmatpush1.bf16.msra.mxu0 %v776
    %948 = vmatprep.mubr.bf16.mxu0 %v217
    %949 = vmatmul.mubr.bf16.gmra.mrb[0].mxu0 %v216
    %v950 = vpop.f32.mrb[0].mxu0
    %v951 = vadd.f32 %v910, %v950
    %v952 = vpop.f32.mrb[0].mxu0
    %v953 = vadd.f32 %v912, %v952
    %v954 = vpop.f32.mrb[0].mxu0
    %v955 = vpop.f32.mrb[0].mxu0
    %956 = vdwg.mxu0
    %957 = vmatprep.subr.bf16.mxu0 0
    %958 = vmatpush1.bf16.msra.mxu0 %v685
    %959 = vmatprep.subr.bf16.mxu0 0
    %960 = vmatpush1.bf16.msra.mxu0 %v688
    %961 = vmatprep.subr.bf16.mxu0 0
    %962 = vmatpush1.bf16.msra.mxu0 %v691
    %963 = vmatprep.subr.bf16.mxu0 0
    %964 = vmatpush1.bf16.msra.mxu0 %v694
    %965 = vmatprep.subr.bf16.mxu0 0
    %966 = vmatpush1.bf16.msra.mxu0 %v697
    %967 = vmatprep.subr.bf16.mxu0 0
    %968 = vmatpush1.bf16.msra.mxu0 %v700
    %969 = vmatprep.subr.bf16.mxu0 0
    %970 = vmatpush1.bf16.msra.mxu0 %v703
    %971 = vmatprep.subr.bf16.mxu0 0
    %972 = vmatpush1.bf16.msra.mxu0 %v706
    %973 = vmatprep.subr.bf16.mxu0 0
    %974 = vmatpush1.bf16.msra.mxu0 %v709
    %975 = vmatprep.subr.bf16.mxu0 0
    %976 = vmatpush1.bf16.msra.mxu0 %v712
    %977 = vmatprep.subr.bf16.mxu0 0
    %978 = vmatpush1.bf16.msra.mxu0 %v715
    %979 = vmatprep.subr.bf16.mxu0 0
    %980 = vmatpush1.bf16.msra.mxu0 %v718
    %981 = vmatprep.subr.bf16.mxu0 0
    %982 = vmatpush1.bf16.msra.mxu0 %v721
    %983 = vmatprep.subr.bf16.mxu0 0
    %984 = vmatpush1.bf16.msra.mxu0 %v724
    %985 = vmatprep.subr.bf16.mxu0 0
    %986 = vmatpush1.bf16.msra.mxu0 %v727
    %987 = vmatprep.subr.bf16.mxu0 0
    %988 = vmatpush1.bf16.msra.mxu0 %v730
    %989 = vmatprep.mubr.bf16.mxu0 %v215
    %990 = vmatmul.mubr.bf16.gmra.mrb[0].mxu0 %v214
    %v991 = vpop.f32.mrb[0].mxu0
    %v992 = vadd.f32 %v359, %v991
    %v993 = vpop.f32.mrb[0].mxu0
    %v994 = vpop.f32.mrb[0].mxu0
    %v995 = vpop.f32.mrb[0].mxu0
    %996 = vdwg.mxu0
    %997 = vmatprep.subr.bf16.mxu0 0
    %998 = vmatpush1.bf16.msra.mxu0 %v733
    %999 = vmatprep.subr.bf16.mxu0 0
    %1000 = vmatpush1.bf16.msra.mxu0 %v736
    %1001 = vmatprep.subr.bf16.mxu0 0
    %1002 = vmatpush1.bf16.msra.mxu0 %v739
    %1003 = vmatprep.subr.bf16.mxu0 0
    %1004 = vmatpush1.bf16.msra.mxu0 %v742
    %1005 = vmatprep.subr.bf16.mxu0 0
    %1006 = vmatpush1.bf16.msra.mxu0 %v745
    %1007 = vmatprep.subr.bf16.mxu0 0
    %1008 = vmatpush1.bf16.msra.mxu0 %v748
    %1009 = vmatprep.subr.bf16.mxu0 0
    %1010 = vmatpush1.bf16.msra.mxu0 %v751
    %1011 = vmatprep.subr.bf16.mxu0 0
    %1012 = vmatpush1.bf16.msra.mxu0 %v754
    %1013 = vmatprep.subr.bf16.mxu0 0
    %1014 = vmatpush1.bf16.msra.mxu0 %v757
    %1015 = vmatprep.subr.bf16.mxu0 0
    %1016 = vmatpush1.bf16.msra.mxu0 %v760
    %1017 = vmatprep.subr.bf16.mxu0 0
    %1018 = vmatpush1.bf16.msra.mxu0 %v763
    %1019 = vmatprep.subr.bf16.mxu0 0
    %1020 = vmatpush1.bf16.msra.mxu0 %v766
    %1021 = vmatprep.subr.bf16.mxu0 0
    %1022 = vmatpush1.bf16.msra.mxu0 %v769
    %1023 = vmatprep.subr.bf16.mxu0 0
    %1024 = vmatpush1.bf16.msra.mxu0 %v772
    %1025 = vmatprep.subr.bf16.mxu0 0
    %1026 = vmatpush1.bf16.msra.mxu0 %v775
    %1027 = vmatprep.subr.bf16.mxu0 0
    %1028 = vmatpush1.bf16.msra.mxu0 %v778
    %1029 = vmatprep.mubr.bf16.mxu0 %v217
    %1030 = vmatmul.mubr.bf16.gmra.mrb[0].mxu0 %v216
    %v1031 = vpop.f32.mrb[0].mxu0
    %v1032 = vadd.f32 %v992, %v1031
    %v1033 = vpop.f32.mrb[0].mxu0
    %v1034 = vpop.f32.mrb[0].mxu0
    %v1035 = vpop.f32.mrb[0].mxu0
    %1036 = vdwg.mxu0
    %vm1037 = vcmp.gt.f32.partialorder %v951, 0.0
    %vm1038 = vcmp.gt.f32.partialorder %v953, 0.0
    %vm1039 = vcmp.gt.f32.partialorder %v1032, 0.0
    %v1040 = vmul.f32 %v951, 0.01
    %v1041 = vmul.f32 %v953, 0.01
    %v1042 = vmul.f32 %v1032, 0.01
    %v1043 = vsel %vm1037, %v951, %v1040
    %v1044 = vsel %vm1038, %v953, %v1041
    %v1045 = vsel %vm1039, %v1032, %v1042
    %v1046 = vpack.c.bf16 %v1043, %v1043
    %v1047 = vpack.c.bf16 %v1044, %v1044
    %v1048 = vpack.c.bf16 %v1045, %v1045
    %v1049 = vunpack.c.l.bf16 %v1046
    %v1050 = vunpack.c.l.bf16 %v1047
    %v1051 = vunpack.c.l.bf16 %v1048
    %v1052 = vld [vmem:[%s5] sm:$0x7]
    %v1053 = vunpack.c.l.bf16 %v1052
    %v1055 = vlaneseq
    %v1056 = vshrl.u32 %v1055, 7
    %v1057 = vsub.s32 0, %v1056
    %v1058 = vrot.slane %v1053, %v1057
    %v1059 = vlaneseq
    %v1060 = vshrl.u32 %v1059, 7
    %v1061 = vsub.s32 2, %v1060
    %v1062 = vrot.slane %v1053, %v1061
    %v1063 = vlaneseq
    %v1064 = vshrl.u32 %v1063, 7
    %v1065 = vsub.s32 4, %v1064
    %v1066 = vrot.slane %v1053, %v1065
    %v1070 = vlaneseq
    %v1071 = vshrl.u32 %v1070, 7
    %v1072 = vsub.s32 0, %v1071
    %v1073 = vrot.slane %v1058, %v1072
    %v1074 = vlaneseq
    %v1075 = vshrl.u32 %v1074, 7
    %v1076 = vsub.s32 0, %v1075
    %v1077 = vrot.slane %v1062, %v1076
    %v1078 = vlaneseq
    %v1079 = vshrl.u32 %v1078, 7
    %v1080 = vsub.s32 0, %v1079
    %v1081 = vrot.slane %v1066, %v1080
    %v1082 = vmul.f32 %v1049, %v1073
    %v1083 = vmul.f32 %v1050, %v1077
    %v1084 = vmul.f32 %v1051, %v1081
    %v1085 = vadd.f32 %v1082, %v1083
    %v1086 = vadd.f32 %v1085, %v1084
    %1087 = vadd.xlane.f32.xlu0 %v1086
    %v1088 = vpop.xlane.xlu0 %1087
    %v1089 = vld [vmem:[#allocation2] sm:$0x1]
    %v1091 = vlaneseq
    %v1092 = vshrl.u32 %v1091, 7
    %v1093 = vsub.s32 0, %v1092
    %v1094 = vrot.slane %v1089, %v1093
    %v1096 = vadd.f32 %v1088, %v1094
    %vm1097 = vcmask 7168
    %1098 = vst.msk [vmem:[%s7] sm:$0xff] %vm1097, %v1096
    // Predicated region
    $region42: #{tpu_custom_call.1} parent=1 // pred_check
      _
    $region43: #{tpu_custom_call.1} parent=1 // pred_check_branch
      %1100 = sbr.rel (0) target = $region45
    $region44: #{tpu_custom_call.1} parent=1 // pred_region
      _
    $region45: #{tpu_custom_call.1} parent=1 // pred_fallthru
      _
    // Predicated region
    $region46: #{tpu_custom_call.1} parent=1 // pred_check
      _
    $region47: #{tpu_custom_call.1} parent=1 // pred_check_branch
      %1102 = sbr.rel (0) target = $region49
    $region48: #{tpu_custom_call.1} parent=1 // pred_region
      _
    $region49: #{tpu_custom_call.1} parent=1 // pred_fallthru
      _
    %1103 = vsyncpa [#allocation4], 1
    %1104 = vsyncpa [#allocation6], 1

</llo_original>
